<compile_context>
chip_gen: v6e
topology: v6e:2x2x1
jax: 0.10.0
libtpu: 0.0.40
codegen_flags: <defaults>
</compile_context>

<pallas_src>
import functools

import jax
import jax.numpy as jnp
from jax.experimental import pallas as pl
from jax.experimental.pallas import tpu as pltpu


def pwl_kernel(kx_ref, a_ref, b_ref, x_ref, o_ref, *, num_keypoints):
    """Piecewise-linear interpolation for a (Dp, tb) lane-dense tile of x.

    kx_ref : (L,) keypoint x-coords in SMEM (scalar reads only).
    a_ref  : (Dp, L-1) per-segment affine intercepts (VMEM, resident).
    b_ref  : (Dp, L-1) per-segment affine slopes     (VMEM, resident).
    """
    L = num_keypoints
    x = x_ref[...].astype(jnp.float32)                    # (Dp, tb)

    # One clamp to the keypoint range reproduces the reference's
    # clip(frac, 0, 1) behaviour at both ends (saturating extrapolation).
    xc = jnp.clip(x, kx_ref[0], kx_ref[L - 1])

    # Segment 0 defaults (covers x <= kx[1], incl. x below kx[0]).
    a = a_ref[:, 0:1]                                     # (Dp, 1) broadcasts
    b = b_ref[:, 0:1]

    # Nested masks: x > kx[s]  <=>  segment index >= s.  Selecting in order
    # reproduces clip(searchsorted(kx, x, side='left'), 1, L-1) with only a
    # compare + two selects per segment and no int index array.
    # Kept Python-unrolled (small L); for large L use
    # lax.fori_loop(..., unroll=True), never a rolled loop.
    for s in range(1, L - 1):
        m = xc > kx_ref[s]
        a = jnp.where(m, a_ref[:, s:s + 1], a)
        b = jnp.where(m, b_ref[:, s:s + 1], b)

    o_ref[...] = (a + b * xc).astype(o_ref.dtype)


def _round_up(v, m):
    return ((v + m - 1) // m) * m


def piecewise_linear_forward(x, keypoints_x, keypoints_y, *,
                             block_batch=32768):
    """x: (N, D); keypoints_x: (L,); keypoints_y: (L, D) -> (N, D)."""
    N, D = x.shape
    L = keypoints_x.shape[0]
    kx = keypoints_x.astype(jnp.float32)

    # Per-segment affine coefficients y = a_s + b_s * x on [kx[s], kx[s+1]].
    # Zero-width segments get b_s = 0 (saturate to the left endpoint; the
    # torch/JAX reference would produce NaN/Inf there).
    ky = jnp.transpose(keypoints_y).astype(jnp.float32)          # (D, L)
    dx = kx[1:] - kx[:-1]                                        # (L-1,)
    inv_dx = jnp.where(dx == 0, jnp.zeros_like(dx), 1.0 / dx)
    b = (ky[:, 1:] - ky[:, :-1]) * inv_dx[None, :]               # (D, L-1)
    a = ky[:, :-1] - b * kx[None, :-1]                           # (D, L-1)

    # Sublane packing: stack `rep` batch slabs along the sublane axis so the
    # tile fills all 8 f32 sublanes even for small D.  The reshape+transpose
    # below is a single XLA transpose pass (same cost as plain (N,D)->(D,N)).
    rep = max(1, 8 // D) if D < 8 else 1
    if rep > 1 and N % rep != 0:
        # TODO(synk): handle the <rep-element ragged batch tail in plain JAX
        # instead of dropping the packing entirely.
        rep = 1
    Np = N // rep
    Dp = D * rep
    xp = x.reshape(rep, Np, D).transpose(0, 2, 1).reshape(Dp, Np)
    if rep > 1:
        a = jnp.tile(a, (rep, 1))
        b = jnp.tile(b, (rep, 1))

    # Batch tile size (lanes).  No padding of the batch: the last block may
    # be ragged and Pallas masks the out-of-range output writes.
    block_batch = max(128, _round_up(block_batch, 128))
    if Np <= block_batch:
        if Np >= 4096:
            # Split into >=2 tiles so the "parallel" grid axis can shard
            # across both v7x TensorCores.
            tb = _round_up((Np + 1) // 2, 128)
        else:
            tb = Np            # block == full array extent -> always legal
    else:
        tb = block_batch       # multiple of 128
    n_tiles = pl.cdiv(Np, tb)

    kernel = functools.partial(pwl_kernel, num_keypoints=L)
    out_p = pl.pallas_call(
        kernel,
        out_shape=jax.ShapeDtypeStruct((Dp, Np), x.dtype),
        grid=(n_tiles,),
        in_specs=[
            pl.BlockSpec(memory_space=pltpu.MemorySpace.SMEM),   # kx (L,)
            pl.BlockSpec((Dp, L - 1), lambda i: (0, 0)),         # a
            pl.BlockSpec((Dp, L - 1), lambda i: (0, 0)),         # b
            pl.BlockSpec((Dp, tb), lambda i: (0, i)),            # x tile
        ],
        out_specs=pl.BlockSpec((Dp, tb), lambda i: (0, i)),
        compiler_params=pltpu.CompilerParams(
            dimension_semantics=("parallel",)),
    )(kx, a, b, xp)

    # Un-pack: (rep*D, Np) -> (N, D); one symmetric XLA transpose.
    # TODO(synk): if the surrounding model keeps activations in (D, N) layout,
    # both wrapper transposes can be removed entirely.
    return out_p.reshape(rep, D, Np).transpose(0, 2, 1).reshape(N, D)


def build_keypoints_y(key, keypoints_x, num_dims, output_min, output_max,
                      idx_inc, idx_dec):
    """Deterministic parameter init + keypoints_y construction (glue)."""
    L = keypoints_x.shape[0]
    idx_tra = [i for i in range(num_dims)
               if i not in idx_inc and i not in idx_dec]
    std = float(jnp.sqrt(1.0 / L))
    k1, k2, k3 = jax.random.split(key, 3)
    w_inc = std * jax.random.normal(k1, (len(idx_inc), L - 1), jnp.float32)
    w_dec = std * jax.random.normal(k2, (len(idx_dec), L - 1), jnp.float32)
    w_tra = std * jax.random.normal(k3, (len(idx_tra), L), jnp.float32)

    diff = output_max - output_min
    ky = jnp.zeros((L, num_dims), jnp.float32)
    if idx_inc:
        w = jnp.cumsum(jax.nn.softmax(w_inc, axis=1), axis=1)
        w = jnp.concatenate(
            [jnp.zeros((len(idx_inc), 1), jnp.float32), w], axis=1).T  # (L, n)
        ky = ky.at[:, jnp.array(idx_inc)].set(diff * w + output_min)
    if idx_dec:
        w = jnp.cumsum(jax.nn.softmax(w_dec, axis=1), axis=1)
        w = jnp.concatenate(
            [jnp.zeros((len(idx_dec), 1), jnp.float32), w], axis=1).T
        ky = ky.at[:, jnp.array(idx_dec)].set(-diff * w + output_max)
    if idx_tra:
        ky = ky.at[:, jnp.array(idx_tra)].set(jax.nn.sigmoid(w_tra).T)
    return ky


def reference_forward(x, keypoints_x, keypoints_y):
    """Pure-JAX mirror of the torch forward (for validation)."""
    L = keypoints_x.shape[0]
    # TODO(synk): torch clamps index max to L (OOB read of keypoints_x for
    # x > keypoints_x[-1]); we clamp to L-1 (identical in-range, saturating
    # extrapolation otherwise).
    idx = jnp.searchsorted(keypoints_x, x)            # side='left'
    idx = jnp.clip(idx, 1, L - 1)
    x_frac = (x - keypoints_x[idx - 1]) / (keypoints_x[idx]
                                           - keypoints_x[idx - 1])
    x_frac = jnp.clip(x_frac, 0.0, 1.0)
    y_l = jnp.take_along_axis(keypoints_y, idx - 1, axis=0)
    y_r = jnp.take_along_axis(keypoints_y, idx, axis=0)
    return y_l + x_frac * (y_r - y_l)


if __name__ == "__main__":
    key = jax.random.PRNGKey(0)
    kx_key, x_key, w_key, x2_key, x3_key = jax.random.split(key, 5)

    num_keypoints = 8
    num_dims = 4
    batch = 16
    output_min, output_max = 0.0, 1.0
    indices_increasing = [0]
    indices_decreasing = [2]          # remaining [1, 3] -> unconstrained

    keypoints_x = jnp.linspace(0.0, 1.0, num_keypoints, dtype=jnp.float32)
    keypoints_y = build_keypoints_y(w_key, keypoints_x, num_dims,
                                    output_min, output_max,
                                    indices_increasing, indices_decreasing)

    # Small check (sublane-packed, single tile, incl. out-of-range x).
    x = jax.random.uniform(x_key, (batch, num_dims), jnp.float32,
                           minval=-0.1, maxval=1.1)
    out = piecewise_linear_forward(x, keypoints_x, keypoints_y)
    out = jax.block_until_ready(out)
    ref = reference_forward(x, keypoints_x, keypoints_y)
    assert out.shape == x.shape and out.dtype == x.dtype
    assert bool(jnp.allclose(out, ref, atol=1e-5, rtol=1e-5)), "mismatch (small)"

    # Multi-tile + ragged last block (no batch padding in the wrapper).
    x2 = jax.random.uniform(x2_key, (1300, num_dims), jnp.float32,
                            minval=0.0, maxval=1.0)
    out2 = piecewise_linear_forward(x2, keypoints_x, keypoints_y,
                                    block_batch=256)
    out2 = jax.block_until_ready(out2)
    ref2 = reference_forward(x2, keypoints_x, keypoints_y)
    assert bool(jnp.allclose(out2, ref2, atol=1e-5, rtol=1e-5)), "mismatch (tiled)"

    # Odd batch -> sublane-packing fallback (rep=1) path.
    x3 = jax.random.uniform(x3_key, (257, num_dims), jnp.float32,
                            minval=-0.2, maxval=1.2)
    out3 = piecewise_linear_forward(x3, keypoints_x, keypoints_y)
    out3 = jax.block_until_ready(out3)
    ref3 = reference_forward(x3, keypoints_x, keypoints_y)
    assert bool(jnp.allclose(out3, ref3, atol=1e-5, rtol=1e-5)), "mismatch (odd)"

    print("KERNEL_OK")
</pallas_src>

<mosaic_0001>
module attributes {stable_mosaic.version = 11 : i64} {
  func.func @pwl_kernel(%arg0: i32, %arg1: memref<8xf32, #tpu.memory_space<smem>>, %arg2: memref<8x7xf32, #tpu.memory_space<vmem>>, %arg3: memref<8x7xf32, #tpu.memory_space<vmem>>, %arg4: memref<8x8xf32, #tpu.memory_space<vmem>>, %arg5: memref<8x8xf32, #tpu.memory_space<vmem>>) attributes {dimension_semantics = [#tpu.dimension_semantics<parallel>], iteration_bounds = array<i64: 1>, scalar_prefetch = 0 : i64, scratch_operands = 0 : i64, tpu.core_type = #tpu.core_type<tc>, window_params = [{transform_indices = @transform_0, window_bounds = array<i64: 8>}, {pipeline_mode = #tpu.pipeline_mode<synchronous>, transform_indices = @transform_1, window_bounds = array<i64: 8, 7>}, {pipeline_mode = #tpu.pipeline_mode<synchronous>, transform_indices = @transform_2, window_bounds = array<i64: 8, 7>}, {transform_indices = @transform_3, window_bounds = array<i64: 8, 8>}, {transform_indices = @transform_4, window_bounds = array<i64: 8, 8>}]} {
    %c0 = arith.constant 0 : index
    %c0_0 = arith.constant 0 : index
    %0 = vector.load %arg4[%c0, %c0_0] : memref<8x8xf32, #tpu.memory_space<vmem>>, vector<8x8xf32>
    %c0_1 = arith.constant 0 : index
    %1 = memref.load %arg1[%c0_1] : memref<8xf32, #tpu.memory_space<smem>>
    %c7 = arith.constant 7 : index
    %2 = memref.load %arg1[%c7] : memref<8xf32, #tpu.memory_space<smem>>
    %3 = vector.broadcast %1 : f32 to vector<8x8xf32>
    %4 = arith.maximumf %3, %0 : vector<8x8xf32>
    %5 = vector.broadcast %2 : f32 to vector<8x8xf32>
    %6 = arith.minimumf %5, %4 : vector<8x8xf32>
    %c0_2 = arith.constant 0 : index
    %c0_3 = arith.constant 0 : index
    %7 = vector.load %arg2[%c0_2, %c0_3] : memref<8x7xf32, #tpu.memory_space<vmem>>, vector<8x1xf32>
    %c0_4 = arith.constant 0 : index
    %c0_5 = arith.constant 0 : index
    %8 = vector.load %arg3[%c0_4, %c0_5] : memref<8x7xf32, #tpu.memory_space<vmem>>, vector<8x1xf32>
    %c1 = arith.constant 1 : index
    %9 = memref.load %arg1[%c1] : memref<8xf32, #tpu.memory_space<smem>>
    %10 = vector.broadcast %9 : f32 to vector<8x8xf32>
    %11 = arith.cmpf ogt, %6, %10 : vector<8x8xf32>
    %c0_6 = arith.constant 0 : index
    %c1_7 = arith.constant 1 : index
    %12 = vector.load %arg2[%c0_6, %c1_7] : memref<8x7xf32, #tpu.memory_space<vmem>>, vector<8x1xf32>
    %13 = vector.shape_cast %12 : vector<8x1xf32> to vector<8x1xf32>
    %14 = vector.broadcast %13 : vector<8x1xf32> to vector<8x8xf32>
    %15 = vector.shape_cast %7 : vector<8x1xf32> to vector<8x1xf32>
    %16 = vector.broadcast %15 : vector<8x1xf32> to vector<8x8xf32>
    %17 = arith.select %11, %14, %16 : vector<8x8xi1>, vector<8x8xf32>
    %c0_8 = arith.constant 0 : index
    %c1_9 = arith.constant 1 : index
    %18 = vector.load %arg3[%c0_8, %c1_9] : memref<8x7xf32, #tpu.memory_space<vmem>>, vector<8x1xf32>
    %19 = vector.shape_cast %18 : vector<8x1xf32> to vector<8x1xf32>
    %20 = vector.broadcast %19 : vector<8x1xf32> to vector<8x8xf32>
    %21 = vector.shape_cast %8 : vector<8x1xf32> to vector<8x1xf32>
    %22 = vector.broadcast %21 : vector<8x1xf32> to vector<8x8xf32>
    %23 = arith.select %11, %20, %22 : vector<8x8xi1>, vector<8x8xf32>
    %c2 = arith.constant 2 : index
    %24 = memref.load %arg1[%c2] : memref<8xf32, #tpu.memory_space<smem>>
    %25 = vector.broadcast %24 : f32 to vector<8x8xf32>
    %26 = arith.cmpf ogt, %6, %25 : vector<8x8xf32>
    %c0_10 = arith.constant 0 : index
    %c2_11 = arith.constant 2 : index
    %27 = vector.load %arg2[%c0_10, %c2_11] : memref<8x7xf32, #tpu.memory_space<vmem>>, vector<8x1xf32>
    %28 = vector.shape_cast %27 : vector<8x1xf32> to vector<8x1xf32>
    %29 = vector.broadcast %28 : vector<8x1xf32> to vector<8x8xf32>
    %30 = arith.select %26, %29, %17 : vector<8x8xi1>, vector<8x8xf32>
    %c0_12 = arith.constant 0 : index
    %c2_13 = arith.constant 2 : index
    %31 = vector.load %arg3[%c0_12, %c2_13] : memref<8x7xf32, #tpu.memory_space<vmem>>, vector<8x1xf32>
    %32 = vector.shape_cast %31 : vector<8x1xf32> to vector<8x1xf32>
    %33 = vector.broadcast %32 : vector<8x1xf32> to vector<8x8xf32>
    %34 = arith.select %26, %33, %23 : vector<8x8xi1>, vector<8x8xf32>
    %c3 = arith.constant 3 : index
    %35 = memref.load %arg1[%c3] : memref<8xf32, #tpu.memory_space<smem>>
    %36 = vector.broadcast %35 : f32 to vector<8x8xf32>
    %37 = arith.cmpf ogt, %6, %36 : vector<8x8xf32>
    %c0_14 = arith.constant 0 : index
    %c3_15 = arith.constant 3 : index
    %38 = vector.load %arg2[%c0_14, %c3_15] : memref<8x7xf32, #tpu.memory_space<vmem>>, vector<8x1xf32>
    %39 = vector.shape_cast %38 : vector<8x1xf32> to vector<8x1xf32>
    %40 = vector.broadcast %39 : vector<8x1xf32> to vector<8x8xf32>
    %41 = arith.select %37, %40, %30 : vector<8x8xi1>, vector<8x8xf32>
    %c0_16 = arith.constant 0 : index
    %c3_17 = arith.constant 3 : index
    %42 = vector.load %arg3[%c0_16, %c3_17] : memref<8x7xf32, #tpu.memory_space<vmem>>, vector<8x1xf32>
    %43 = vector.shape_cast %42 : vector<8x1xf32> to vector<8x1xf32>
    %44 = vector.broadcast %43 : vector<8x1xf32> to vector<8x8xf32>
    %45 = arith.select %37, %44, %34 : vector<8x8xi1>, vector<8x8xf32>
    %c4 = arith.constant 4 : index
    %46 = memref.load %arg1[%c4] : memref<8xf32, #tpu.memory_space<smem>>
    %47 = vector.broadcast %46 : f32 to vector<8x8xf32>
    %48 = arith.cmpf ogt, %6, %47 : vector<8x8xf32>
    %c0_18 = arith.constant 0 : index
    %c4_19 = arith.constant 4 : index
    %49 = vector.load %arg2[%c0_18, %c4_19] : memref<8x7xf32, #tpu.memory_space<vmem>>, vector<8x1xf32>
    %50 = vector.shape_cast %49 : vector<8x1xf32> to vector<8x1xf32>
    %51 = vector.broadcast %50 : vector<8x1xf32> to vector<8x8xf32>
    %52 = arith.select %48, %51, %41 : vector<8x8xi1>, vector<8x8xf32>
    %c0_20 = arith.constant 0 : index
    %c4_21 = arith.constant 4 : index
    %53 = vector.load %arg3[%c0_20, %c4_21] : memref<8x7xf32, #tpu.memory_space<vmem>>, vector<8x1xf32>
    %54 = vector.shape_cast %53 : vector<8x1xf32> to vector<8x1xf32>
    %55 = vector.broadcast %54 : vector<8x1xf32> to vector<8x8xf32>
    %56 = arith.select %48, %55, %45 : vector<8x8xi1>, vector<8x8xf32>
    %c5 = arith.constant 5 : index
    %57 = memref.load %arg1[%c5] : memref<8xf32, #tpu.memory_space<smem>>
    %58 = vector.broadcast %57 : f32 to vector<8x8xf32>
    %59 = arith.cmpf ogt, %6, %58 : vector<8x8xf32>
    %c0_22 = arith.constant 0 : index
    %c5_23 = arith.constant 5 : index
    %60 = vector.load %arg2[%c0_22, %c5_23] : memref<8x7xf32, #tpu.memory_space<vmem>>, vector<8x1xf32>
    %61 = vector.shape_cast %60 : vector<8x1xf32> to vector<8x1xf32>
    %62 = vector.broadcast %61 : vector<8x1xf32> to vector<8x8xf32>
    %63 = arith.select %59, %62, %52 : vector<8x8xi1>, vector<8x8xf32>
    %c0_24 = arith.constant 0 : index
    %c5_25 = arith.constant 5 : index
    %64 = vector.load %arg3[%c0_24, %c5_25] : memref<8x7xf32, #tpu.memory_space<vmem>>, vector<8x1xf32>
    %65 = vector.shape_cast %64 : vector<8x1xf32> to vector<8x1xf32>
    %66 = vector.broadcast %65 : vector<8x1xf32> to vector<8x8xf32>
    %67 = arith.select %59, %66, %56 : vector<8x8xi1>, vector<8x8xf32>
    %c6 = arith.constant 6 : index
    %68 = memref.load %arg1[%c6] : memref<8xf32, #tpu.memory_space<smem>>
    %69 = vector.broadcast %68 : f32 to vector<8x8xf32>
    %70 = arith.cmpf ogt, %6, %69 : vector<8x8xf32>
    %c0_26 = arith.constant 0 : index
    %c6_27 = arith.constant 6 : index
    %71 = vector.load %arg2[%c0_26, %c6_27] : memref<8x7xf32, #tpu.memory_space<vmem>>, vector<8x1xf32>
    %72 = vector.shape_cast %71 : vector<8x1xf32> to vector<8x1xf32>
    %73 = vector.broadcast %72 : vector<8x1xf32> to vector<8x8xf32>
    %74 = arith.select %70, %73, %63 : vector<8x8xi1>, vector<8x8xf32>
    %c0_28 = arith.constant 0 : index
    %c6_29 = arith.constant 6 : index
    %75 = vector.load %arg3[%c0_28, %c6_29] : memref<8x7xf32, #tpu.memory_space<vmem>>, vector<8x1xf32>
    %76 = vector.shape_cast %75 : vector<8x1xf32> to vector<8x1xf32>
    %77 = vector.broadcast %76 : vector<8x1xf32> to vector<8x8xf32>
    %78 = arith.select %70, %77, %67 : vector<8x8xi1>, vector<8x8xf32>
    %79 = arith.mulf %78, %6 : vector<8x8xf32>
    %80 = arith.addf %74, %79 : vector<8x8xf32>
    %c0_30 = arith.constant 0 : index
    %c0_31 = arith.constant 0 : index
    %81 = vector.load %arg5[%c0_30, %c0_31] : memref<8x8xf32, #tpu.memory_space<vmem>>, vector<8x8xf32>
    tpu.vector_store %arg5[%c0_30, %c0_31], %80 {strides = array<i32>} : memref<8x8xf32, #tpu.memory_space<vmem>>, vector<8x8xf32>,
    return
  }
  func.func @transform_0(%arg0: i32) -> i32 {
    %c0_i32 = arith.constant 0 : i32
    %c0_i32_0 = arith.constant 0 : i32
    return %c0_i32 : i32
  }
  func.func @transform_1(%arg0: i32) -> (i32, i32) {
    %c0_i32 = arith.constant 0 : i32
    %c0_i32_0 = arith.constant 0 : i32
    %c0_i32_1 = arith.constant 0 : i32
    return %c0_i32, %c0_i32_0 : i32, i32
  }
  func.func @transform_2(%arg0: i32) -> (i32, i32) {
    %c0_i32 = arith.constant 0 : i32
    %c0_i32_0 = arith.constant 0 : i32
    %c0_i32_1 = arith.constant 0 : i32
    return %c0_i32, %c0_i32_0 : i32, i32
  }
  func.func @transform_3(%arg0: i32) -> (i32, i32) {
    %c0_i32 = arith.constant 0 : i32
    %c0_i32_0 = arith.constant 0 : i32
    return %c0_i32, %arg0 : i32, i32
  }
  func.func @transform_4(%arg0: i32) -> (i32, i32) {
    %c0_i32 = arith.constant 0 : i32
    %c0_i32_0 = arith.constant 0 : i32
    return %c0_i32, %arg0 : i32, i32
  }
}

</mosaic_0001>

<llo_original>
// kernel: tpu_custom_call.1
$region0: #{tpu_custom_call.1}
  #allocation0 [shape = 'u32[]', space=smem, size = 0x4, offset = 0x4, fixed_abs, tag = 'smem constant byte address 0x4 - core index']
  #allocation1 [shape = 'u32[144,128]{1,0:T(1,128)}', space=vmem, size = 0x12000, scoped, tag = 'internal scratch']
  %s0 = inlined_call_operand.hbm [shape: f32[8], index: 0, kind: input, shape index: {}]
  %s1 = inlined_call_operand.hbm [shape: f32[8,7], index: 1, kind: input, shape index: {}]
  %s2 = inlined_call_operand.hbm [shape: f32[8,7], index: 2, kind: input, shape index: {}]
  %s3 = inlined_call_operand.hbm [shape: f32[8,8], index: 3, kind: input, shape index: {}]
  %s4 = inlined_call_operand.hbm [shape: f32[8,8], index: 4, kind: output, shape index: {}]
  %s5 = sld [smem:[#allocation0]]
  $region42: #{tpu_custom_call.1} parent=0
    _
  %s7 = ssub.s32 1, %s5
  %s8 = scalar_select 0, %s7, %s5
  $region1: #{tpu_custom_call.1} parent=0
    #allocation2 [shape = 'u8[512]{0}', space=smem, size = 0x200, scoped, tag = 'input window, operand 0, single buffered']
    #allocation3 [shape = 's32[1]{0}', space=sflag, size = 0x4, scoped, tag = 'scoped memory for tpu_custom_call.1']
    #allocation4 [shape = 's32[1]{0}', space=sflag, size = 0x4, scoped, tag = 'scoped memory for tpu_custom_call.1']
    #allocation5 [shape = 's32[1]{0}', space=sflag, size = 0x4, scoped, tag = 'scoped memory for tpu_custom_call.1']
    #allocation6 [shape = 'u8[4096]{0}', space=vmem, size = 0x1000, scoped, tag = 'input window, operand 1, single buffered']
    #allocation7 [shape = 'u8[4096]{0}', space=vmem, size = 0x1000, scoped, tag = 'input window, operand 2, single buffered']
    #allocation8 [shape = 's32[1]{0}', space=sflag, size = 0x4, scoped, tag = 'scoped memory for tpu_custom_call.1']
    #allocation9 [shape = 'u8[4096]{0}', space=vmem, size = 0x1000, scoped, tag = 'input window, operand 3, single buffered']
    #allocation10 [shape = 'u8[4096]{0}', space=vmem, size = 0x1000, scoped, tag = 'output window, operand 0, single buffered']
    %9 = vsyncpa [#allocation5], 0
    %10 = vsyncpa [#allocation3], 0
    %11 = vsyncpa [#allocation8], 0
    %12 = vsyncpa [#allocation4], 0
    // Predicated region
    $region2: #{tpu_custom_call.1} parent=1 // pred_check
      _
    $region3: #{tpu_custom_call.1} parent=1 // pred_check_branch
      %14 = sbr.rel (0) target = $region5
    $region4: #{tpu_custom_call.1} parent=1 // pred_region
      %s16 = ssub.s32 16, 16
      %17 = vsyncadd [#allocation5], %s16
      %20 = dma.hbm_to_smem %s0, 16, [#allocation2], [#allocation5]
    $region5: #{tpu_custom_call.1} parent=1 // pred_fallthru
      _
    // Predicated region
    $region6: #{tpu_custom_call.1} parent=1 // pred_check
      _
    $region7: #{tpu_custom_call.1} parent=1 // pred_check_branch
      %22 = sbr.rel (0) target = $region9
    $region8: #{tpu_custom_call.1} parent=1 // pred_region
      %s24 = ssub.s32 128, 128
      %25 = vsyncadd [#allocation3], %s24
      %s27 = sshll.u32 [#allocation6], 4
      %s28 = int_to_ptr.vmem [resolvable:$true] %s27
      %30 = dma.hbm_to_vmem [thread:$0]  %s1, 128, %s28, [#allocation3]
    $region9: #{tpu_custom_call.1} parent=1 // pred_fallthru
      _
    // Predicated region
    $region10: #{tpu_custom_call.1} parent=1 // pred_check
      _
    $region11: #{tpu_custom_call.1} parent=1 // pred_check_branch
      %32 = sbr.rel (0) target = $region13
    $region12: #{tpu_custom_call.1} parent=1 // pred_region
      %s34 = ssub.s32 128, 128
      %35 = vsyncadd [#allocation8], %s34
      %s37 = sshll.u32 [#allocation7], 4
      %s38 = int_to_ptr.vmem [resolvable:$true] %s37
      %40 = dma.hbm_to_vmem [thread:$0]  %s2, 128, %s38, [#allocation8]
    $region13: #{tpu_custom_call.1} parent=1 // pred_fallthru
      _
    // Predicated region
    $region14: #{tpu_custom_call.1} parent=1 // pred_check
      _
    $region15: #{tpu_custom_call.1} parent=1 // pred_check_branch
      %42 = sbr.rel (0) target = $region17
    $region16: #{tpu_custom_call.1} parent=1 // pred_region
      %s44 = ssub.s32 128, 128
      %45 = vsyncadd [#allocation8], %s44
      %s47 = sshll.u32 [#allocation9], 4
      %s48 = int_to_ptr.vmem [resolvable:$true] %s47
      %50 = dma.hbm_to_vmem [thread:$0]  %s3, 128, %s48, [#allocation8]
    $region17: #{tpu_custom_call.1} parent=1 // pred_fallthru
      _
    // Predicated region
    $region18: #{tpu_custom_call.1} parent=1 // pred_check
      _
    $region19: #{tpu_custom_call.1} parent=1 // pred_check_branch
      %52 = sbr.rel (0) target = $region21
    $region20: #{tpu_custom_call.1} parent=1 // pred_region
      %53 = dma.done [#allocation5], 16
    $region21: #{tpu_custom_call.1} parent=1 // pred_fallthru
      _
    // Predicated region
    $region22: #{tpu_custom_call.1} parent=1 // pred_check
      _
    $region23: #{tpu_custom_call.1} parent=1 // pred_check_branch
      %55 = sbr.rel (0) target = $region25
    $region24: #{tpu_custom_call.1} parent=1 // pred_region
      %56 = dma.done [#allocation3], 128
    $region25: #{tpu_custom_call.1} parent=1 // pred_fallthru
      _
    // Predicated region
    $region26: #{tpu_custom_call.1} parent=1 // pred_check
      _
    $region27: #{tpu_custom_call.1} parent=1 // pred_check_branch
      %58 = sbr.rel (0) target = $region29
    $region28: #{tpu_custom_call.1} parent=1 // pred_region
      %59 = dma.done [#allocation8], 128
    $region29: #{tpu_custom_call.1} parent=1 // pred_fallthru
      _
    // Predicated region
    $region30: #{tpu_custom_call.1} parent=1 // pred_check
      _
    $region31: #{tpu_custom_call.1} parent=1 // pred_check_branch
      %61 = sbr.rel (0) target = $region33
    $region32: #{tpu_custom_call.1} parent=1 // pred_region
      %62 = dma.done [#allocation8], 128
    $region33: #{tpu_custom_call.1} parent=1 // pred_fallthru
      _
    %63 = sfence
    %v64 = vld [vmem:[#allocation9] sm:$0xff]
    %s65 = sld [smem:[#allocation2]]
    %s66 = sld [smem:[#allocation2 + $0x7]]
    %v67 = vstv %s65
    %v68 = vmax.f32 %v67, %v64
    %v69 = vstv %s66
    %v70 = vmin.f32 %v69, %v68
    %v71 = vld [vmem:[#allocation6] sm:$0xff]
    %v72 = vld [vmem:[#allocation7] sm:$0xff]
    %s73 = sld [smem:[#allocation2 + $0x1]]
    %v74 = vstv %s73
    %vm75 = vcmp.gt.f32.partialorder %v70, %v74
    %77 = vset.pattern.permute.xlu0 1
    %78 = vperm.xlu0 %77, %v71
    %v79 = vpop.permute.xlu0 %78
    %81 = vset.pattern.permute.xlu0 0
    %82 = vperm.xlu0 %81, %v71
    %v83 = vpop.permute.xlu0 %82
    %v85 = vsel %vm75, %v79, %v83
    %87 = vset.pattern.permute.xlu0 1
    %88 = vperm.xlu0 %87, %v72
    %v89 = vpop.permute.xlu0 %88
    %91 = vset.pattern.permute.xlu0 0
    %92 = vperm.xlu0 %91, %v72
    %v93 = vpop.permute.xlu0 %92
    %v95 = vsel %vm75, %v89, %v93
    %s96 = sld [smem:[#allocation2 + $0x2]]
    %v97 = vstv %s96
    %vm98 = vcmp.gt.f32.partialorder %v70, %v97
    %99 = vset.pattern.permute.xlu0 2
    %100 = vperm.xlu0 %99, %v71
    %v101 = vpop.permute.xlu0 %100
    %v103 = vsel %vm98, %v101, %v85
    %104 = vset.pattern.permute.xlu0 2
    %105 = vperm.xlu0 %104, %v72
    %v106 = vpop.permute.xlu0 %105
    %v108 = vsel %vm98, %v106, %v95
    %s109 = sld [smem:[#allocation2 + $0x3]]
    %v110 = vstv %s109
    %vm111 = vcmp.gt.f32.partialorder %v70, %v110
    %112 = vset.pattern.permute.xlu0 3
    %113 = vperm.xlu0 %112, %v71
    %v114 = vpop.permute.xlu0 %113
    %v116 = vsel %vm111, %v114, %v103
    %117 = vset.pattern.permute.xlu0 3
    %118 = vperm.xlu0 %117, %v72
    %v119 = vpop.permute.xlu0 %118
    %v121 = vsel %vm111, %v119, %v108
    %s122 = sld [smem:[#allocation2 + $0x4]]
    %v123 = vstv %s122
    %vm124 = vcmp.gt.f32.partialorder %v70, %v123
    %125 = vset.pattern.permute.xlu0 4
    %126 = vperm.xlu0 %125, %v71
    %v127 = vpop.permute.xlu0 %126
    %v129 = vsel %vm124, %v127, %v116
    %130 = vset.pattern.permute.xlu0 4
    %131 = vperm.xlu0 %130, %v72
    %v132 = vpop.permute.xlu0 %131
    %v134 = vsel %vm124, %v132, %v121
    %s135 = sld [smem:[#allocation2 + $0x5]]
    %v136 = vstv %s135
    %vm137 = vcmp.gt.f32.partialorder %v70, %v136
    %138 = vset.pattern.permute.xlu0 5
    %139 = vperm.xlu0 %138, %v71
    %v140 = vpop.permute.xlu0 %139
    %v142 = vsel %vm137, %v140, %v129
    %143 = vset.pattern.permute.xlu0 5
    %144 = vperm.xlu0 %143, %v72
    %v145 = vpop.permute.xlu0 %144
    %v147 = vsel %vm137, %v145, %v134
    %s148 = sld [smem:[#allocation2 + $0x6]]
    %v149 = vstv %s148
    %vm150 = vcmp.gt.f32.partialorder %v70, %v149
    %151 = vset.pattern.permute.xlu0 6
    %152 = vperm.xlu0 %151, %v71
    %v153 = vpop.permute.xlu0 %152
    %v155 = vsel %vm150, %v153, %v142
    %156 = vset.pattern.permute.xlu0 6
    %157 = vperm.xlu0 %156, %v72
    %v158 = vpop.permute.xlu0 %157
    %v160 = vsel %vm150, %v158, %v147
    %v161 = vmul.f32 %v160, %v70
    %v162 = vadd.f32 %v155, %v161
    %vm163 = vcmask 64512
    %164 = vst.msk [vmem:[#allocation10] sm:$0xff] %vm163, %v162
    // Predicated region
    $region34: #{tpu_custom_call.1} parent=1 // pred_check
      _
    $region35: #{tpu_custom_call.1} parent=1 // pred_check_branch
      %166 = sbr.rel (0) target = $region37
    $region36: #{tpu_custom_call.1} parent=1 // pred_region
      %s168 = ssub.s32 128, 128
      %169 = vsyncadd [#allocation4], %s168
      %s171 = sshll.u32 [#allocation10], 4
      %s172 = int_to_ptr.vmem [resolvable:$true] %s171
      %174 = dma.vmem_to_hbm [thread:$0]  %s172, 128, %s4, [#allocation4]
    $region37: #{tpu_custom_call.1} parent=1 // pred_fallthru
      _
    // Predicated region
    $region38: #{tpu_custom_call.1} parent=1 // pred_check
      _
    $region39: #{tpu_custom_call.1} parent=1 // pred_check_branch
      %176 = sbr.rel (0) target = $region41
    $region40: #{tpu_custom_call.1} parent=1 // pred_region
      %177 = dma.done [#allocation4], 128
    $region41: #{tpu_custom_call.1} parent=1 // pred_fallthru
      _
    %178 = vsyncpa [#allocation3], 1
    %179 = vsyncpa [#allocation8], 1
    %180 = vsyncpa [#allocation4], 1
    %181 = vsyncpa [#allocation5], 1

</llo_original>
